<compile_context>
chip_gen: v7x
topology: tpu7x:2x2x1
jax: 0.10.0
libtpu: 0.0.40
codegen_flags: <defaults>
</compile_context>

<pallas_src>
import functools

import jax
import jax.numpy as jnp
from jax.experimental import pallas as pl
from jax.experimental.pallas import tpu as pltpu


def _batchnorm_kernel(x_ref, gamma_ref, beta_ref, out_ref, *, eps, inv_b):
    # x_ref:     (n_batch, TN)  strip in VMEM
    # gamma_ref: (1, TN)
    # beta_ref:  (1, TN)
    x = x_ref[...]
    xf = x if x.dtype == jnp.float32 else x.astype(jnp.float32)

    # Fused single-traversal reductions: sum and sum-of-squares together.
    s1 = jnp.sum(xf, axis=0, keepdims=True)
    s2 = jnp.sum(xf * xf, axis=0, keepdims=True)
    mu = s1 * inv_b
    # Biased variance (unbiased=False in the PyTorch reference). Clamp so the
    # E[x^2] - mu^2 form can never feed rsqrt a (slightly) negative argument.
    var = jnp.maximum(s2 * inv_b - mu * mu, 0.0)
    inv_std = jax.lax.rsqrt(var + eps)

    # Precompute per-neuron scale/shift rows so per-element work is a single
    # broadcasted multiply-add over the (n_batch, TN) strip.
    scale = gamma_ref[...].astype(jnp.float32) * inv_std        # (1, TN)
    shift = beta_ref[...].astype(jnp.float32) - scale * mu      # (1, TN)

    out_ref[...] = (xf * scale + shift).astype(out_ref.dtype)


def _physical_vmem_bytes():
    """Per-core physical VMEM; conservative 64 MiB (v7x) if undetectable."""
    try:
        info = pltpu.get_tpu_info()
        for attr in ("vmem_capacity_bytes", "vmem_bytes", "vmem_size_bytes"):
            v = getattr(info, attr, None)
            if v:
                return int(v)
    except Exception:
        pass
    return 64 * 1024 * 1024


def _pick_tile_n(n_batch, n_pad, budget_bytes, itemsize):
    """Pick a 128-multiple tile_n that divides n_pad (so no partial/masked
    tail strip), keeps the double-buffered working set under `budget_bytes`,
    and — when n_pad >= 256 — prefers an even number (>=2) of grid steps so
    the 'parallel' axis shards evenly across both v7x TensorCores."""
    # Per lane column, double-buffered: x-in + out tiles plus gamma/beta (f32).
    bytes_per_lane = 2 * (2 * n_batch * itemsize + 2 * 4)
    tn_max = budget_bytes // max(bytes_per_lane, 1)
    tn_max = max(128, (tn_max // 128) * 128)
    tn_max = min(tn_max, n_pad)

    cands = [d for d in range(128, tn_max + 1, 128) if n_pad % d == 0]
    if not cands:  # unreachable (128 | n_pad), kept for safety
        cands = [128]

    if n_pad >= 256:
        even = [d for d in cands if (n_pad // d) % 2 == 0]
        multi = [d for d in cands if (n_pad // d) >= 2]
        if even:
            return even[-1]
        if multi:
            return multi[-1]
    return cands[-1]


def custom_batchnorm_manual(x, gamma, beta, eps=1e-05, tile_n=None):
    """Forward pass of CustomBatchNormManualModule as a Pallas TPU kernel.

    Args:
      x:     (n_batch, n_neurons) float32
      gamma: (n_neurons,) float32
      beta:  (n_neurons,) float32
    Returns:
      (n_batch, n_neurons) batch-normalized output.
    """
    if x.ndim != 2:
        raise Exception(f"Expected 2D input, got shape {x.shape}")
    n_batch, n_neurons = x.shape
    if gamma.shape[0] != n_neurons or beta.shape[0] != n_neurons:
        raise Exception(
            f"Size DOES matter! Received {x.shape}, expected {gamma.shape[0]}"
        )

    # Keep the neuron (lane) axis a 128 multiple: every output store stays an
    # unmasked lane-dense vst and the budgeted tiled path is always taken.
    n_pad = ((n_neurons + 127) // 128) * 128
    if n_pad != n_neurons:
        pad = n_pad - n_neurons
        x_p = jnp.pad(x, ((0, 0), (0, pad)))
        gamma_p = jnp.pad(gamma, (0, pad), constant_values=1.0)
        beta_p = jnp.pad(beta, (0, pad))
    else:
        x_p, gamma_p, beta_p = x, gamma, beta

    itemsize = jnp.dtype(x.dtype).itemsize
    phys_vmem = _physical_vmem_bytes()
    # Generation-aware budget for the pipelined working set: ~3/4 of physical
    # VMEM minus margin => ~44 MiB on v7x (64 MiB/TC), ~92 MiB on v5e/v6e.
    budget = (phys_vmem * 3) // 4 - (4 << 20)

    if tile_n is None:
        tile_n = _pick_tile_n(n_batch, n_pad, budget, itemsize)
    num_tiles = pl.cdiv(n_pad, tile_n)

    # TODO(synk): for n_batch so large that even a (n_batch, 128) strip blows
    # the VMEM budget, a two-pass design is needed (an "arbitrary" grid axis
    # over batch accumulating s1/s2 in scratch, then a normalize pass).

    gamma2d = gamma_p.reshape(1, n_pad).astype(jnp.float32)
    beta2d = beta_p.reshape(1, n_pad).astype(jnp.float32)

    kernel = functools.partial(
        _batchnorm_kernel, eps=float(eps), inv_b=1.0 / float(n_batch)
    )

    # Explicit scoped-VMEM limit: working set (double-buffered x-in/out +
    # params) plus headroom, capped at physical capacity. Avoids v5e's 16 MiB
    # default limit gating tile size.
    working_set = 2 * (2 * n_batch * tile_n * itemsize + 2 * tile_n * 4)
    vmem_limit = int(min(phys_vmem, max(16 << 20, working_set + (8 << 20))))

    cost = pl.CostEstimate(
        flops=5 * n_batch * n_pad,
        transcendentals=n_pad,
        bytes_accessed=2 * n_batch * n_pad * itemsize + 8 * n_pad,
    )

    out = pl.pallas_call(
        kernel,
        out_shape=jax.ShapeDtypeStruct((n_batch, n_pad), x.dtype),
        grid_spec=pl.GridSpec(
            grid=(num_tiles,),
            in_specs=[
                pl.BlockSpec((n_batch, tile_n), lambda j: (0, j)),
                pl.BlockSpec((1, tile_n), lambda j: (0, j)),
                pl.BlockSpec((1, tile_n), lambda j: (0, j)),
            ],
            out_specs=pl.BlockSpec((n_batch, tile_n), lambda j: (0, j)),
        ),
        compiler_params=pltpu.CompilerParams(
            dimension_semantics=("parallel",),
            vmem_limit_bytes=vmem_limit,
        ),
        cost_estimate=cost,
    )(x_p, gamma2d, beta2d)

    if n_pad != n_neurons:
        out = out[:, :n_neurons]
    return out


if __name__ == "__main__":
    key = jax.random.PRNGKey(0)
    eps = 1e-05

    def reference(x, gamma, beta):
        mu = jnp.mean(x, axis=0)
        var = jnp.mean((x - mu) ** 2, axis=0)
        return gamma * (x - mu) / jnp.sqrt(var + eps) + beta

    # Case 1: lane-aligned N. Auto tile picker chooses tile_n=128 here, giving
    # an even 2-step grid (exercises tiling + megacore-friendly split).
    n_batch, n_neurons = 8, 256
    k1, k2 = jax.random.split(key)
    x = jax.random.normal(k1, (n_batch, n_neurons), dtype=jnp.float32)
    # Deterministic parameter init matching the module's __init__:
    gamma = jnp.ones((n_neurons,), dtype=jnp.float32)
    beta = jnp.zeros((n_neurons,), dtype=jnp.float32)
    out = jax.block_until_ready(custom_batchnorm_manual(x, gamma, beta, eps))
    assert out.shape == (n_batch, n_neurons)
    assert jnp.allclose(out, reference(x, gamma, beta), atol=1e-5, rtol=1e-5), (
        "mismatch vs reference (aligned N)"
    )

    # Case 2: ragged N (exercises the pad-to-128 path and output slice-back).
    n_batch2, n_neurons2 = 16, 100
    x2 = jax.random.normal(k2, (n_batch2, n_neurons2), dtype=jnp.float32)
    gamma2 = jnp.ones((n_neurons2,), dtype=jnp.float32)
    beta2 = jnp.zeros((n_neurons2,), dtype=jnp.float32)
    out2 = jax.block_until_ready(custom_batchnorm_manual(x2, gamma2, beta2, eps))
    assert out2.shape == (n_batch2, n_neurons2)
    assert jnp.allclose(out2, reference(x2, gamma2, beta2), atol=1e-5, rtol=1e-5), (
        "mismatch vs reference (ragged N)"
    )

    print("KERNEL_OK")
</pallas_src>

<mosaic_0001>
module attributes {stable_mosaic.version = 11 : i64} {
  func.func @_batchnorm_kernel(%arg0: i32, %arg1: memref<8x128xf32, #tpu.memory_space<vmem>>, %arg2: memref<1x128xf32, #tpu.memory_space<vmem>>, %arg3: memref<1x128xf32, #tpu.memory_space<vmem>>, %arg4: memref<8x128xf32, #tpu.memory_space<vmem>>) attributes {dimension_semantics = [#tpu.dimension_semantics<parallel>], iteration_bounds = array<i64: 2>, scalar_prefetch = 0 : i64, scratch_operands = 0 : i64, tpu.core_type = #tpu.core_type<tc>, window_params = [{transform_indices = @transform_0, window_bounds = array<i64: 8, 128>}, {transform_indices = @transform_1, window_bounds = array<i64: 1, 128>}, {transform_indices = @transform_2, window_bounds = array<i64: 1, 128>}, {transform_indices = @transform_3, window_bounds = array<i64: 8, 128>}]} {
    %c0 = arith.constant 0 : index
    %c0_0 = arith.constant 0 : index
    %0 = vector.load %arg1[%c0, %c0_0] : memref<8x128xf32, #tpu.memory_space<vmem>>, vector<8x128xf32>
    %cst = arith.constant dense<0.000000e+00> : vector<128xf32>
    %1 = vector.multi_reduction <add>, %0, %cst [0] : vector<8x128xf32> to vector<128xf32>
    %2 = vector.shape_cast %1 : vector<128xf32> to vector<1x128xf32>
    %3 = arith.mulf %0, %0 : vector<8x128xf32>
    %cst_1 = arith.constant dense<0.000000e+00> : vector<128xf32>
    %4 = vector.multi_reduction <add>, %3, %cst_1 [0] : vector<8x128xf32> to vector<128xf32>
    %5 = vector.shape_cast %4 : vector<128xf32> to vector<1x128xf32>
    %cst_2 = arith.constant 1.250000e-01 : f32
    %6 = vector.broadcast %cst_2 : f32 to vector<1x128xf32>
    %7 = arith.mulf %2, %6 : vector<1x128xf32>
    %cst_3 = arith.constant 1.250000e-01 : f32
    %8 = vector.broadcast %cst_3 : f32 to vector<1x128xf32>
    %9 = arith.mulf %5, %8 : vector<1x128xf32>
    %10 = arith.mulf %7, %7 : vector<1x128xf32>
    %11 = arith.subf %9, %10 : vector<1x128xf32>
    %cst_4 = arith.constant 0.000000e+00 : f32
    %12 = vector.broadcast %cst_4 : f32 to vector<1x128xf32>
    %13 = arith.maximumf %11, %12 : vector<1x128xf32>
    %cst_5 = arith.constant 9.99999974E-6 : f32
    %14 = vector.broadcast %cst_5 : f32 to vector<1x128xf32>
    %15 = arith.addf %13, %14 : vector<1x128xf32>
    %16 = math.rsqrt %15 : vector<1x128xf32>
    %c0_6 = arith.constant 0 : index
    %c0_7 = arith.constant 0 : index
    %17 = vector.load %arg2[%c0_6, %c0_7] : memref<1x128xf32, #tpu.memory_space<vmem>>, vector<1x128xf32>
    %18 = arith.mulf %17, %16 : vector<1x128xf32>
    %c0_8 = arith.constant 0 : index
    %c0_9 = arith.constant 0 : index
    %19 = vector.load %arg3[%c0_8, %c0_9] : memref<1x128xf32, #tpu.memory_space<vmem>>, vector<1x128xf32>
    %20 = arith.mulf %18, %7 : vector<1x128xf32>
    %21 = arith.subf %19, %20 : vector<1x128xf32>
    %22 = vector.broadcast %18 : vector<1x128xf32> to vector<8x128xf32>
    %23 = arith.mulf %0, %22 : vector<8x128xf32>
    %24 = vector.broadcast %21 : vector<1x128xf32> to vector<8x128xf32>
    %25 = arith.addf %23, %24 : vector<8x128xf32>
    %c0_10 = arith.constant 0 : index
    %c0_11 = arith.constant 0 : index
    %26 = vector.load %arg4[%c0_10, %c0_11] : memref<8x128xf32, #tpu.memory_space<vmem>>, vector<8x128xf32>
    tpu.vector_store %arg4[%c0_10, %c0_11], %25 {strides = array<i32>} : memref<8x128xf32, #tpu.memory_space<vmem>>, vector<8x128xf32>,
    return
  }
  func.func @transform_0(%arg0: i32) -> (i32, i32) {
    %c0_i32 = arith.constant 0 : i32
    %c0_i32_0 = arith.constant 0 : i32
    return %c0_i32, %arg0 : i32, i32
  }
  func.func @transform_1(%arg0: i32) -> (i32, i32) {
    %c0_i32 = arith.constant 0 : i32
    %c0_i32_0 = arith.constant 0 : i32
    return %c0_i32, %arg0 : i32, i32
  }
  func.func @transform_2(%arg0: i32) -> (i32, i32) {
    %c0_i32 = arith.constant 0 : i32
    %c0_i32_0 = arith.constant 0 : i32
    return %c0_i32, %arg0 : i32, i32
  }
  func.func @transform_3(%arg0: i32) -> (i32, i32) {
    %c0_i32 = arith.constant 0 : i32
    %c0_i32_0 = arith.constant 0 : i32
    return %c0_i32, %arg0 : i32, i32
  }
}

</mosaic_0001>

<llo_original>
// kernel: tpu_custom_call.1
$region0: #{tpu_custom_call.1}
  #allocation0 [shape = 'u32[]', space=smem, size = 0x4, offset = 0x4, fixed_abs, tag = 'smem constant byte address 0x4 - core index']
  #allocation1 [shape = 'u32[144,128]{1,0:T(1,128)}', space=vmem, size = 0x12000, scoped, tag = 'internal scratch']
  %s0 = inlined_call_operand.hbm [shape: f32[8,256], index: 0, kind: input, shape index: {}]
  %s1 = inlined_call_operand.vmem [shape: f32[1,256], index: 1, kind: input, shape index: {}]
  %s2 = inlined_call_operand.vmem [shape: f32[1,256], index: 2, kind: input, shape index: {}]
  %s3 = inlined_call_operand.hbm [shape: f32[8,256], index: 3, kind: output, shape index: {}]
  %s4 = sld [smem:[#allocation0]]
  $region49: #{tpu_custom_call.1} parent=0
    _
  %s6 = ssub.s32 1, %s4
  %s7 = scalar_select 0, %s6, %s4
  $region1: #{tpu_custom_call.1} parent=0
    #allocation2 [shape = 'u8[8192]{0}', space=vmem, size = 0x2000, scoped, tag = 'input window, operand 0']
    #allocation3 [shape = 's32[2]{0}', space=sflag, size = 0x8, scoped, tag = 'scoped memory for tpu_custom_call.1']
    #allocation4 [shape = 's32[2]{0}', space=sflag, size = 0x8, scoped, tag = 'scoped memory for tpu_custom_call.1']
    #allocation5 [shape = 'u8[8192]{0}', space=vmem, size = 0x2000, scoped, tag = 'output window, operand 0']
    %8 = vsyncpa [#allocation3], 0
    %s9 = scalar_lea.sflag [#allocation3], 1
    %10 = vsyncpa %s9, 0
    %11 = vsyncpa [#allocation4], 0
    %s12 = scalar_lea.sflag [#allocation4], 1
    %13 = vsyncpa %s12, 0
    loop: start=0, step=1, limit=4
    $region2: #{tpu_custom_call.1} parent=1 // loop_pre_header
      _
    $region3: #{tpu_custom_call.1} parent=1 // loop_header
      %s15 = sphi 0, %s19
      %p16 = scmp.ge.s32.totalorder %s15, 4
      %s25 = sphi 0, %s27
      %s28 = sphi 0, %s25
      %s29 = sphi 0, %s28
      %s45 = sphi 0, %s29
      %s51 = sphi 0, %s53
      %s54 = sphi 0, %s51
      %s55 = sphi 0, %s54
      %s71 = sphi 0, %s55
      %s77 = sphi 0, %s79
      %s80 = sphi 0, %s77
      %s81 = sphi 0, %s80
      %s97 = sphi 0, %s81
      %s103 = sphi 0, %s105
      %s106 = sphi 0, %s103
      %s107 = sphi 0, %s106
      %s123 = sphi 0, %s107
    $region4: #{tpu_custom_call.1} parent=1 // loop_header_branch
      %18 = sbr.rel (%p16) target = $region8
    $region5: #{tpu_custom_call.1} parent=1 // loop_body
      %s20 = ssub.s32 %s15, 1
      %s21 = ssub.s32 %s15, 2
      %s22 = sadd.s32 %s15, 1
      %s23 = ssub.s32 %s15, %s22
      %p24 = scmp.eq.s32.totalorder %s23, 0
      %s26 = sadd.s32 %s25, 1
      %s27 = scalar_select %p24, %s25, %s26
      %p30 = pneg %p24
      %p31 = scmp.eq.s32.totalorder %s15, 1
      %p32 = por %p30, %p31
      %p33 = scmp.ne.s32.totalorder %s25, %s28
      %p34 = scmp.eq.s32.totalorder %s15, 0
      %p35 = por %p33, %p34
      %p36 = scmp.ne.s32.totalorder %s25, %s28
      %p37 = scmp.eq.s32.totalorder %s20, 1
      %p38 = por %p36, %p37
      %p39 = scmp.ne.s32.totalorder %s28, %s29
      %p40 = scmp.eq.s32.totalorder %s20, 0
      %p41 = por %p39, %p40
      %p42 = scmp.ne.s32.totalorder %s28, %s29
      %p43 = scmp.eq.s32.totalorder %s21, 1
      %p44 = por %p42, %p43
      %p46 = scmp.ne.s32.totalorder %s29, %s45
      %p47 = scmp.eq.s32.totalorder %s21, 0
      %p48 = por %p46, %p47
      %s49 = ssub.s32 %s15, %s22
      %p50 = scmp.eq.s32.totalorder %s49, 0
      %s52 = sadd.s32 %s51, 1
      %s53 = scalar_select %p50, %s51, %s52
      %p56 = pneg %p50
      %p57 = scmp.eq.s32.totalorder %s15, 1
      %p58 = por %p56, %p57
      %p59 = scmp.ne.s32.totalorder %s51, %s54
      %p60 = scmp.eq.s32.totalorder %s15, 0
      %p61 = por %p59, %p60
      %p62 = scmp.ne.s32.totalorder %s51, %s54
      %p63 = scmp.eq.s32.totalorder %s20, 1
      %p64 = por %p62, %p63
      %p65 = scmp.ne.s32.totalorder %s54, %s55
      %p66 = scmp.eq.s32.totalorder %s20, 0
      %p67 = por %p65, %p66
      %p68 = scmp.ne.s32.totalorder %s54, %s55
      %p69 = scmp.eq.s32.totalorder %s21, 1
      %p70 = por %p68, %p69
      %p72 = scmp.ne.s32.totalorder %s55, %s71
      %p73 = scmp.eq.s32.totalorder %s21, 0
      %p74 = por %p72, %p73
      %s75 = ssub.s32 %s15, %s22
      %p76 = scmp.eq.s32.totalorder %s75, 0
      %s78 = sadd.s32 %s77, 1
      %s79 = scalar_select %p76, %s77, %s78
      %p82 = pneg %p76
      %p83 = scmp.eq.s32.totalorder %s15, 1
      %p84 = por %p82, %p83
      %p85 = scmp.ne.s32.totalorder %s77, %s80
      %p86 = scmp.eq.s32.totalorder %s15, 0
      %p87 = por %p85, %p86
      %p88 = scmp.ne.s32.totalorder %s77, %s80
      %p89 = scmp.eq.s32.totalorder %s20, 1
      %p90 = por %p88, %p89
      %p91 = scmp.ne.s32.totalorder %s80, %s81
      %p92 = scmp.eq.s32.totalorder %s20, 0
      %p93 = por %p91, %p92
      %p94 = scmp.ne.s32.totalorder %s80, %s81
      %p95 = scmp.eq.s32.totalorder %s21, 1
      %p96 = por %p94, %p95
      %p98 = scmp.ne.s32.totalorder %s81, %s97
      %p99 = scmp.eq.s32.totalorder %s21, 0
      %p100 = por %p98, %p99
      %s101 = ssub.s32 %s15, %s22
      %p102 = scmp.eq.s32.totalorder %s101, 0
      %s104 = sadd.s32 %s103, 1
      %s105 = scalar_select %p102, %s103, %s104
      %p108 = pneg %p102
      %p109 = scmp.eq.s32.totalorder %s15, 1
      %p110 = por %p108, %p109
      %p111 = scmp.ne.s32.totalorder %s103, %s106
      %p112 = scmp.eq.s32.totalorder %s15, 0
      %p113 = por %p111, %p112
      %p114 = scmp.ne.s32.totalorder %s103, %s106
      %p115 = scmp.eq.s32.totalorder %s20, 1
      %p116 = por %p114, %p115
      %p117 = scmp.ne.s32.totalorder %s106, %s107
      %p118 = scmp.eq.s32.totalorder %s20, 0
      %p119 = por %p117, %p118
      %p120 = scmp.ne.s32.totalorder %s106, %s107
      %p121 = scmp.eq.s32.totalorder %s21, 1
      %p122 = por %p120, %p121
      %p124 = scmp.ne.s32.totalorder %s107, %s123
      %p125 = scmp.eq.s32.totalorder %s21, 0
      %p126 = por %p124, %p125
      %p127 = scmp.le.s32.totalorder 1, %s15
      %p128 = scmp.lt.s32.totalorder %s15, 3
      %p129 = pnand %p127, %p128
      %p130 = pneg %p129
      // Predicated region
      $region9: #{tpu_custom_call.1} parent=5 // pred_check
        _
      $region10: #{tpu_custom_call.1} parent=5 // pred_check_branch
        %132 = sbr.rel (%p129) target = $region12
      $region11: #{tpu_custom_call.1} parent=5 // pred_region
        %s133 = ssub.s32 %s15, 1
      $region12: #{tpu_custom_call.1} parent=5 // pred_fallthru
        _
      %p134 = scmp.lt.s32.totalorder %s15, 2
      // Predicated region
      $region13: #{tpu_custom_call.1} parent=5 // pred_check
        %p135 = pneg %p134
      $region14: #{tpu_custom_call.1} parent=5 // pred_check_branch
        %137 = sbr.rel (%p135) target = $region16
      $region15: #{tpu_custom_call.1} parent=5 // pred_region
        // Predicated region
        $region17: #{tpu_custom_call.1} parent=15 // pred_check
          %p138 = pneg %p35
        $region18: #{tpu_custom_call.1} parent=15 // pred_check_branch
          %140 = sbr.rel (%p138) target = $region20
        $region19: #{tpu_custom_call.1} parent=15 // pred_region
          %s141 = sand.u32 %s25, 1
          %s142 = scalar_lea.sflag [#allocation3], %s141
          %s143 = sand.u32 %s25, 1
          %s144 = smul.addr %s143, 8
          %s145 = scalar_lea.vmem [#allocation2], %s144
          %s147 = ssub.s32 128, 128
          %148 = vsyncadd %s142, %s147
          %s149 = smul.addr %s15, 128
          %s150 = scalar_lea.hbm %s0, %s149
          %s152 = sshll.u32 %s145, 4
          %s153 = int_to_ptr.vmem [resolvable:$true] %s152
          %155 = dma.hbm_to_vmem [thread:$0]  %s150, 128, %s153, %s142
        $region20: #{tpu_custom_call.1} parent=15 // pred_fallthru
          _
        // Predicated region
        $region21: #{tpu_custom_call.1} parent=15 // pred_check
          %p156 = pneg %p61
        $region22: #{tpu_custom_call.1} parent=15 // pred_check_branch
          %158 = sbr.rel (%p156) target = $region24
        $region23: #{tpu_custom_call.1} parent=15 // pred_region
          %p159 = scmp.lt.s32.totalorder %s15, 1
          %s160 = scalar_select %p159, %s15, 1
          %s161 = scalar_lea.vmem %s1, %s160
        $region24: #{tpu_custom_call.1} parent=15 // pred_fallthru
          _
        // Predicated region
        $region25: #{tpu_custom_call.1} parent=15 // pred_check
          %p162 = pneg %p87
        $region26: #{tpu_custom_call.1} parent=15 // pred_check_branch
          %164 = sbr.rel (%p162) target = $region28
        $region27: #{tpu_custom_call.1} parent=15 // pred_region
          %p165 = scmp.lt.s32.totalorder %s15, 1
          %s166 = scalar_select %p165, %s15, 1
          %s167 = scalar_lea.vmem %s2, %s166
        $region28: #{tpu_custom_call.1} parent=15 // pred_fallthru
          _
      $region16: #{tpu_custom_call.1} parent=5 // pred_fallthru
        _
      %p168 = scmp.le.s32.totalorder 1, %s15
      %p169 = scmp.lt.s32.totalorder %s15, 3
      %p170 = pnand %p168, %p169
      %p171 = pneg %p170
      // Predicated region
      $region29: #{tpu_custom_call.1} parent=5 // pred_check
        _
      $region30: #{tpu_custom_call.1} parent=5 // pred_check_branch
        %173 = sbr.rel (%p170) target = $region32
      $region31: #{tpu_custom_call.1} parent=5 // pred_region
        %s174 = ssub.s32 %s15, 1
        %s175 = sand.u32 %s28, 1
        %s176 = scalar_lea.sflag [#allocation3], %s175
        %s177 = sand.u32 %s28, 1
        %s178 = smul.addr %s177, 8
        %s179 = scalar_lea.vmem [#allocation2], %s178
        // Predicated region
        $region33: #{tpu_custom_call.1} parent=31 // pred_check
          %p180 = pneg %p41
        $region34: #{tpu_custom_call.1} parent=31 // pred_check_branch
          %182 = sbr.rel (%p180) target = $region36
        $region35: #{tpu_custom_call.1} parent=31 // pred_region
          %183 = dma.done %s176, 128
        $region36: #{tpu_custom_call.1} parent=31 // pred_fallthru
          _
        %s184 = sand.u32 %s28, 1
        %s185 = scalar_lea.sflag [#allocation3], %s184
        %s186 = sand.u32 %s28, 1
        %s187 = smul.addr %s186, 8
        %s188 = scalar_lea.vmem [#allocation2], %s187
        %p189 = pneg %p41
        %p190 = pneg %p38
        %p191 = scmp.lt.s32.totalorder %s20, 1
        %s192 = scalar_select %p191, %s20, 1
        %s193 = scalar_lea.vmem %s1, %s192
        %p194 = pneg %p67
        %p195 = pneg %p64
        %p196 = scmp.lt.s32.totalorder %s20, 1
        %s197 = scalar_select %p196, %s20, 1
        %s198 = scalar_lea.vmem %s2, %s197
        %p199 = pneg %p93
        %p200 = pneg %p90
        %p201 = pneg %p119
        %p202 = pneg %p116
        %s203 = sand.u32 %s106, 1
        %s204 = scalar_lea.sflag [#allocation4], %s203
        %s205 = sand.u32 %s106, 1
        %s206 = smul.addr %s205, 8
        %s207 = scalar_lea.vmem [#allocation5], %s206
        %p208 = scmp.lt.s32.totalorder %s20, 1
        %s209 = scalar_select %p208, %s20, 1
        %s210 = scalar_lea.vmem %s1, %s209
        %p211 = scmp.lt.s32.totalorder %s20, 1
        %s212 = scalar_select %p211, %s20, 1
        %s213 = scalar_lea.vmem %s2, %s212
        %v214 = vld [vmem:[%s179] sm:$0xff]
        %v215 = vrot.slane %v214, 4
        %v216 = vadd.f32 %v214, %v215
        %v217 = vrot.slane %v216, 2
        %v218 = vadd.f32 %v216, %v217
        %v219 = vrot.slane %v218, 1
        %v220 = vadd.f32 %v218, %v219
        %v221 = vmul.f32 %v214, %v214
        %v222 = vrot.slane %v221, 4
        %v223 = vadd.f32 %v221, %v222
        %v224 = vrot.slane %v223, 2
        %v225 = vadd.f32 %v223, %v224
        %v226 = vrot.slane %v225, 1
        %v227 = vadd.f32 %v225, %v226
        %v228 = vmul.f32 %v220, 0.125
        %v229 = vmul.f32 %v227, 0.125
        %v230 = vmul.f32 %v228, %v228
        %v231 = vsub.f32 %v229, %v230
        %v232 = vmax.f32 %v231, 0.0
        %v233 = vadd.f32 %v232, 1e-05
        %v234 = vrsqrt.pop %v233
        %v235 = vld [vmem:[%s210] sm:$0x1]
        %v236 = vmul.f32 %v235, %v234
        %v237 = vld [vmem:[%s213] sm:$0x1]
        %v238 = vmul.f32 %v236, %v228
        %v239 = vsub.f32 %v237, %v238
        %v241 = vlaneseq
        %v242 = vshrl.u32 %v241, 7
        %v243 = vsub.s32 0, %v242
        %v244 = vrot.slane %v236, %v243
        %v246 = vmul.f32 %v214, %v244
        %v248 = vlaneseq
        %v249 = vshrl.u32 %v248, 7
        %v250 = vsub.s32 0, %v249
        %v251 = vrot.slane %v239, %v250
        %v253 = vadd.f32 %v246, %v251
        %254 = vst [vmem:[%s207] sm:$0xff] %v253
        %s255 = sand.u32 %s106, 1
        %s256 = scalar_lea.sflag [#allocation4], %s255
        %s257 = sand.u32 %s106, 1
        %s258 = smul.addr %s257, 8
        %s259 = scalar_lea.vmem [#allocation5], %s258
        // Predicated region
        $region37: #{tpu_custom_call.1} parent=31 // pred_check
          %p260 = pneg %p116
        $region38: #{tpu_custom_call.1} parent=31 // pred_check_branch
          %262 = sbr.rel (%p260) target = $region40
        $region39: #{tpu_custom_call.1} parent=31 // pred_region
          %s264 = ssub.s32 128, 128
          %265 = vsyncadd %s256, %s264
          %s266 = smul.addr %s20, 128
          %s267 = scalar_lea.hbm %s3, %s266
          %s269 = sshll.u32 %s259, 4
          %s270 = int_to_ptr.vmem [resolvable:$true] %s269
          %272 = dma.vmem_to_hbm [thread:$0]  %s270, 128, %s267, %s256
        $region40: #{tpu_custom_call.1} parent=31 // pred_fallthru
          _
      $region32: #{tpu_custom_call.1} parent=5 // pred_fallthru
        _
      %p273 = scmp.le.s32.totalorder 2, %s15
      // Predicated region
      $region41: #{tpu_custom_call.1} parent=5 // pred_check
        %p274 = pneg %p273
      $region42: #{tpu_custom_call.1} parent=5 // pred_check_branch
        %276 = sbr.rel (%p274) target = $region44
      $region43: #{tpu_custom_call.1} parent=5 // pred_region
        %s277 = ssub.s32 %s15, 2
        // Predicated region
        $region45: #{tpu_custom_call.1} parent=43 // pred_check
          %p278 = pneg %p122
        $region46: #{tpu_custom_call.1} parent=43 // pred_check_branch
          %280 = sbr.rel (%p278) target = $region48
        $region47: #{tpu_custom_call.1} parent=43 // pred_region
          %s281 = sand.u32 %s107, 1
          %s282 = scalar_lea.sflag [#allocation4], %s281
          %s283 = sand.u32 %s107, 1
          %s284 = smul.addr %s283, 8
          %s285 = scalar_lea.vmem [#allocation5], %s284
          %286 = dma.done %s282, 128
        $region48: #{tpu_custom_call.1} parent=43 // pred_fallthru
          _
      $region44: #{tpu_custom_call.1} parent=5 // pred_fallthru
        _
    $region6: #{tpu_custom_call.1} parent=1 // loop_footer
      %s19 = sadd.s32 1, %s15
    $region7: #{tpu_custom_call.1} parent=1 // loop_footer_branch
      %14 = sbr.rel target = $region3
    $region8: #{tpu_custom_call.1} parent=1 // loop_exit
      _
    %287 = vsyncpa [#allocation3], 1
    %s288 = scalar_lea.sflag [#allocation3], 1
    %289 = vsyncpa %s288, 1
    %290 = vsyncpa [#allocation4], 1
    %s291 = scalar_lea.sflag [#allocation4], 1
    %292 = vsyncpa %s291, 1

</llo_original>
